<compile_context>
chip_gen: v6e
topology: v6e:2x2x1
jax: 0.10.0
libtpu: 0.0.40
codegen_flags: <defaults>
</compile_context>

<pallas_src>
import jax
import jax.numpy as jnp
from jax.experimental import pallas as pl
from jax.experimental.pallas import tpu as pltpu

LANE = 128


def _round_up(n, m):
    return ((n + m - 1) // m) * m


def mlp_kernel(x_ref, w1_ref, b1_ref, w2_ref, b2_ref, out_ref):
    # In-kernel downcast of the activation operand (VPU): x streams from HBM
    # once, in its original dtype, with no wrapper-side cast round trip.
    x = x_ref[...].astype(w1_ref.dtype)
    # Layer 1 on the MXU, f32 accumulation.
    h = jnp.dot(x, w1_ref[...], preferred_element_type=jnp.float32)
    # Bias-add + ReLU in f32 on the VPU; single downcast feeds matmul 2.
    h = jnp.maximum(h + b1_ref[...], 0.0).astype(w2_ref.dtype)
    # Layer 2 on the MXU, f32 accumulation; bias-add in f32.
    y = jnp.dot(h, w2_ref[...], preferred_element_type=jnp.float32)
    out_ref[...] = (y + b2_ref[...]).astype(out_ref.dtype)


def prepare_params(w1, b1, w2, b2, *, compute_dtype=jnp.bfloat16):
    """One-time padding/cast of the parameters (hoisted out of the forward).

    w1: (input_size, hidden_size)    b1: (hidden_size,) or (1, hidden_size)
    w2: (hidden_size, num_classes)   b2: (num_classes,) or (1, num_classes)
    Weights are stored transposed vs. PyTorch, i.e. (in, out), so y = x @ W + b.
    Zero padding of hidden/class lanes is exact (ReLU(0)=0, padded class cols
    carry bias 0 and are sliced off).
    """
    in_f, hid = w1.shape
    n_cls = w2.shape[1]
    hid_p = _round_up(hid, LANE)
    cls_p = _round_up(n_cls, LANE)
    w1p = jnp.zeros((in_f, hid_p), compute_dtype).at[:, :hid].set(w1.astype(compute_dtype))
    b1p = jnp.zeros((1, hid_p), jnp.float32).at[:, :hid].set(
        b1.reshape(1, -1).astype(jnp.float32))
    w2p = jnp.zeros((hid_p, cls_p), compute_dtype).at[:hid, :n_cls].set(w2.astype(compute_dtype))
    b2p = jnp.zeros((1, cls_p), jnp.float32).at[:, :n_cls].set(
        b2.reshape(1, -1).astype(jnp.float32))
    return {"w1": w1p, "b1": b1p, "w2": w2p, "b2": b2p, "num_classes": n_cls}


def simple_classification_net(x, params, *, batch_tile=512):
    """Forward pass: Linear -> ReLU -> Linear, fused in one Pallas kernel.

    x: (B, input_size) -> logits (B, num_classes) in x.dtype.
    `params` comes from prepare_params (padded, bf16 weights).
    """
    w1p, b1p, w2p, b2p = params["w1"], params["b1"], params["w2"], params["b2"]
    n_cls = params["num_classes"]
    B, in_f = x.shape
    assert w1p.shape[0] == in_f, "x feature dim must match prepared W1"
    hid_p = w1p.shape[1]
    cls_p = w2p.shape[1]
    out_dtype = x.dtype

    # Adaptive batch tile:
    #   - small/medium batch: one grid step, rows rounded only to the sublane
    #     multiple for x's dtype (no 128-row slab padding);
    #   - large batch: 256..batch_tile rows per step (fills the 256-wide
    #     v6e/v7x MXU, amortizes ~0.35 us/step overhead) with grid length >= 2
    #     so the batch axis shards across both v7x TensorCores.
    sublanes = 8 * max(1, 4 // jnp.dtype(x.dtype).itemsize)  # f32:8, bf16:16
    if B <= 256:
        tb = _round_up(B, sublanes)
    else:
        tb = min(batch_tile, _round_up(pl.cdiv(B, 2), LANE))
    grid = (pl.cdiv(B, tb),)

    flops = 2 * B * (in_f * hid_p + hid_p * cls_p)
    bytes_accessed = (
        x.size * x.dtype.itemsize
        + sum(int(p.size) * p.dtype.itemsize for p in (w1p, b1p, w2p, b2p))
        + B * cls_p * jnp.dtype(out_dtype).itemsize
    )

    out = pl.pallas_call(
        mlp_kernel,
        out_shape=jax.ShapeDtypeStruct((B, cls_p), out_dtype),
        grid_spec=pltpu.PrefetchScalarGridSpec(
            num_scalar_prefetch=0,
            grid=grid,
            in_specs=[
                # Batch-tiled x; full-extent (un-padded) feature axis.
                pl.BlockSpec((tb, in_f), lambda i: (i, 0)),
                # Weights/biases: constant index_map -> VMEM-resident.
                pl.BlockSpec((in_f, hid_p), lambda i: (0, 0)),
                pl.BlockSpec((1, hid_p), lambda i: (0, 0)),
                pl.BlockSpec((hid_p, cls_p), lambda i: (0, 0)),
                pl.BlockSpec((1, cls_p), lambda i: (0, 0)),
            ],
            out_specs=pl.BlockSpec((tb, cls_p), lambda i: (i, 0)),
        ),
        compiler_params=pltpu.CompilerParams(
            dimension_semantics=("parallel",),
        ),
        cost_estimate=pl.CostEstimate(
            flops=flops, transcendentals=0, bytes_accessed=bytes_accessed),
    )(x, w1p, b1p, w2p, b2p)

    # Lane padding on classes sliced off here; fuses into the consumer under jit.
    return out[:, :n_cls]


def init_params(key, input_size, hidden_size, num_classes, dtype=jnp.float32):
    """Deterministic synthetic params, mimicking nn.Linear's uniform init."""
    k1, k2, k3, k4 = jax.random.split(key, 4)
    bound1 = 1.0 / (input_size ** 0.5)
    bound2 = 1.0 / (hidden_size ** 0.5)
    # Stored as (in, out) = PyTorch weight.T
    w1 = jax.random.uniform(k1, (input_size, hidden_size), dtype, -bound1, bound1)
    b1 = jax.random.uniform(k2, (1, hidden_size), dtype, -bound1, bound1)
    w2 = jax.random.uniform(k3, (hidden_size, num_classes), dtype, -bound2, bound2)
    b2 = jax.random.uniform(k4, (1, num_classes), dtype, -bound2, bound2)
    return w1, b1, w2, b2


if __name__ == "__main__":
    key = jax.random.PRNGKey(0)
    kx, kp = jax.random.split(key)

    batch = 8
    input_size = 32
    hidden_size = 64
    num_classes = 16

    x = jax.random.normal(kx, (batch, input_size), jnp.float32)
    w1, b1, w2, b2 = init_params(kp, input_size, hidden_size, num_classes)

    # One-time parameter padding/cast (hoisted out of the per-call forward).
    params = prepare_params(w1, b1, w2, b2)

    # jit the whole forward: the class-dim slice fuses into the consumer and
    # per-op dispatch around the microsecond-scale kernel disappears.
    forward = jax.jit(lambda xb: simple_classification_net(xb, params))

    logits = jax.block_until_ready(forward(x))
    assert logits.shape == (batch, num_classes)

    # Tight check vs. a reference mirroring the kernel's bf16-operand /
    # f32-accumulation math.
    xb16, w1b, w2b = (t.astype(jnp.bfloat16) for t in (x, w1, w2))
    h_ref = jnp.maximum(
        jnp.dot(xb16, w1b, preferred_element_type=jnp.float32) + b1, 0.0)
    ref_bf16 = jnp.dot(h_ref.astype(jnp.bfloat16), w2b,
                       preferred_element_type=jnp.float32) + b2
    assert jnp.allclose(logits, ref_bf16, atol=1e-4, rtol=1e-4)

    # Loose check vs. the pure-f32 PyTorch-style forward (bf16 operand rounding).
    ref_f32 = jnp.maximum(x @ w1 + b1, 0.0) @ w2 + b2
    assert jnp.allclose(logits, ref_f32, atol=5e-2, rtol=5e-2)

    print("KERNEL_OK")
</pallas_src>

<mosaic_0001>
module attributes {stable_mosaic.version = 11 : i64} {
  func.func @mlp_kernel(%arg0: i32, %arg1: memref<8x32xf32, #tpu.memory_space<vmem>>, %arg2: memref<32x128xbf16, #tpu.memory_space<vmem>>, %arg3: memref<1x128xf32, #tpu.memory_space<vmem>>, %arg4: memref<128x128xbf16, #tpu.memory_space<vmem>>, %arg5: memref<1x128xf32, #tpu.memory_space<vmem>>, %arg6: memref<8x128xf32, #tpu.memory_space<vmem>>) attributes {dimension_semantics = [#tpu.dimension_semantics<parallel>], iteration_bounds = array<i64: 1>, scalar_prefetch = 0 : i64, scratch_operands = 0 : i64, tpu.core_type = #tpu.core_type<tc>, window_params = [{transform_indices = @transform_0, window_bounds = array<i64: 8, 32>}, {pipeline_mode = #tpu.pipeline_mode<synchronous>, transform_indices = @transform_1, window_bounds = array<i64: 32, 128>}, {pipeline_mode = #tpu.pipeline_mode<synchronous>, transform_indices = @transform_2, window_bounds = array<i64: 1, 128>}, {pipeline_mode = #tpu.pipeline_mode<synchronous>, transform_indices = @transform_3, window_bounds = array<i64: 128, 128>}, {pipeline_mode = #tpu.pipeline_mode<synchronous>, transform_indices = @transform_4, window_bounds = array<i64: 1, 128>}, {transform_indices = @transform_5, window_bounds = array<i64: 8, 128>}]} {
    %c0 = arith.constant 0 : index
    %c0_0 = arith.constant 0 : index
    %0 = vector.load %arg1[%c0, %c0_0] : memref<8x32xf32, #tpu.memory_space<vmem>>, vector<8x32xf32>
    %1 = arith.truncf %0 : vector<8x32xf32> to vector<8x32xbf16>
    %c0_1 = arith.constant 0 : index
    %c0_2 = arith.constant 0 : index
    %2 = vector.load %arg2[%c0_1, %c0_2] : memref<32x128xbf16, #tpu.memory_space<vmem>>, vector<32x128xbf16>
    %cst = arith.constant dense<0.000000e+00> : vector<8x128xf32>
    %3 = tpu.matmul %1, %2, %cst {dimension_numbers = #tpu.dot_dimension_numbers<[1], [0], [0], [1], [0, 0, 1, 1], [], []>} : vector<8x32xbf16>, vector<32x128xbf16>, vector<8x128xf32> -> vector<8x128xf32>
    %c0_3 = arith.constant 0 : index
    %c0_4 = arith.constant 0 : index
    %4 = vector.load %arg3[%c0_3, %c0_4] : memref<1x128xf32, #tpu.memory_space<vmem>>, vector<1x128xf32>
    %5 = vector.broadcast %4 : vector<1x128xf32> to vector<8x128xf32>
    %6 = arith.addf %3, %5 : vector<8x128xf32>
    %cst_5 = arith.constant 0.000000e+00 : f32
    %7 = vector.broadcast %cst_5 : f32 to vector<8x128xf32>
    %8 = arith.maximumf %6, %7 : vector<8x128xf32>
    %9 = arith.truncf %8 : vector<8x128xf32> to vector<8x128xbf16>
    %c0_6 = arith.constant 0 : index
    %c0_7 = arith.constant 0 : index
    %10 = vector.load %arg4[%c0_6, %c0_7] : memref<128x128xbf16, #tpu.memory_space<vmem>>, vector<128x128xbf16>
    %cst_8 = arith.constant dense<0.000000e+00> : vector<8x128xf32>
    %11 = tpu.matmul %9, %10, %cst_8 {dimension_numbers = #tpu.dot_dimension_numbers<[1], [0], [0], [1], [0, 0, 1, 1], [], []>} : vector<8x128xbf16>, vector<128x128xbf16>, vector<8x128xf32> -> vector<8x128xf32>
    %c0_9 = arith.constant 0 : index
    %c0_10 = arith.constant 0 : index
    %12 = vector.load %arg5[%c0_9, %c0_10] : memref<1x128xf32, #tpu.memory_space<vmem>>, vector<1x128xf32>
    %13 = vector.broadcast %12 : vector<1x128xf32> to vector<8x128xf32>
    %14 = arith.addf %11, %13 : vector<8x128xf32>
    %c0_11 = arith.constant 0 : index
    %c0_12 = arith.constant 0 : index
    %15 = vector.load %arg6[%c0_11, %c0_12] : memref<8x128xf32, #tpu.memory_space<vmem>>, vector<8x128xf32>
    tpu.vector_store %arg6[%c0_11, %c0_12], %14 {strides = array<i32>} : memref<8x128xf32, #tpu.memory_space<vmem>>, vector<8x128xf32>,
    return
  }
  func.func @transform_0(%arg0: i32) -> (i32, i32) {
    %c0_i32 = arith.constant 0 : i32
    %c0_i32_0 = arith.constant 0 : i32
    return %arg0, %c0_i32 : i32, i32
  }
  func.func @transform_1(%arg0: i32) -> (i32, i32) {
    %c0_i32 = arith.constant 0 : i32
    %c0_i32_0 = arith.constant 0 : i32
    %c0_i32_1 = arith.constant 0 : i32
    return %c0_i32, %c0_i32_0 : i32, i32
  }
  func.func @transform_2(%arg0: i32) -> (i32, i32) {
    %c0_i32 = arith.constant 0 : i32
    %c0_i32_0 = arith.constant 0 : i32
    %c0_i32_1 = arith.constant 0 : i32
    return %c0_i32, %c0_i32_0 : i32, i32
  }
  func.func @transform_3(%arg0: i32) -> (i32, i32) {
    %c0_i32 = arith.constant 0 : i32
    %c0_i32_0 = arith.constant 0 : i32
    %c0_i32_1 = arith.constant 0 : i32
    return %c0_i32, %c0_i32_0 : i32, i32
  }
  func.func @transform_4(%arg0: i32) -> (i32, i32) {
    %c0_i32 = arith.constant 0 : i32
    %c0_i32_0 = arith.constant 0 : i32
    %c0_i32_1 = arith.constant 0 : i32
    return %c0_i32, %c0_i32_0 : i32, i32
  }
  func.func @transform_5(%arg0: i32) -> (i32, i32) {
    %c0_i32 = arith.constant 0 : i32
    %c0_i32_0 = arith.constant 0 : i32
    return %arg0, %c0_i32 : i32, i32
  }
}

</mosaic_0001>

<llo_original>
// kernel: _lambda_.1
$region0: #{_lambda_.1}
  #allocation0 [shape = 'u32[]', space=smem, size = 0x4, offset = 0x4, fixed_abs, tag = 'smem constant byte address 0x4 - core index']
  #allocation1 [shape = 'u32[144,128]{1,0:T(1,128)}', space=vmem, size = 0x12000, scoped, tag = 'internal scratch']
  %s0 = inlined_call_operand.hbm [shape: f32[8,32], index: 0, kind: input, shape index: {}]
  %s1 = inlined_call_operand.hbm [shape: bf16[32,128], index: 1, kind: input, shape index: {}]
  %s2 = inlined_call_operand.vmem [shape: f32[1,128], index: 2, kind: input, shape index: {}]
  %s3 = inlined_call_operand.hbm [shape: bf16[128,128], index: 3, kind: input, shape index: {}]
  %s4 = inlined_call_operand.vmem [shape: f32[1,128], index: 4, kind: input, shape index: {}]
  %s5 = inlined_call_operand.hbm [shape: f32[8,128], index: 5, kind: output, shape index: {}]
  %s6 = sld [smem:[#allocation0]]
  $region42: #{_lambda_.1} parent=0
    _
  %s8 = ssub.s32 1, %s6
  %s9 = scalar_select 0, %s8, %s6
  $region1: #{_lambda_.1} parent=0
    #allocation2 [shape = 'u8[4096]{0}', space=vmem, size = 0x1000, scoped, tag = 'input window, operand 0, single buffered']
    #allocation3 [shape = 's32[1]{0}', space=sflag, size = 0x4, scoped, tag = 'scoped memory for _lambda_.1']
    #allocation4 [shape = 's32[1]{0}', space=sflag, size = 0x4, scoped, tag = 'scoped memory for _lambda_.1']
    #allocation5 [shape = 'u8[8192]{0}', space=vmem, size = 0x2000, scoped, tag = 'input window, operand 1, single buffered']
    #allocation6 [shape = 's32[1]{0}', space=sflag, size = 0x4, scoped, tag = 'scoped memory for _lambda_.1']
    #allocation7 [shape = 'u8[32768]{0}', space=vmem, size = 0x8000, scoped, tag = 'input window, operand 3, single buffered']
    #allocation8 [shape = 'u8[4096]{0}', space=vmem, size = 0x1000, scoped, tag = 'output window, operand 0, single buffered']
    %10 = vsyncpa [#allocation3], 0
    %11 = vsyncpa [#allocation6], 0
    %12 = vsyncpa [#allocation4], 0
    // Predicated region
    $region2: #{_lambda_.1} parent=1 // pred_check
      _
    $region3: #{_lambda_.1} parent=1 // pred_check_branch
      %14 = sbr.rel (0) target = $region5
    $region4: #{_lambda_.1} parent=1 // pred_region
      %s16 = ssub.s32 128, 128
      %17 = vsyncadd [#allocation3], %s16
      %s19 = sshll.u32 [#allocation2], 4
      %s20 = int_to_ptr.vmem [resolvable:$true] %s19
      %22 = dma.hbm_to_vmem [thread:$0]  %s0, 128, %s20, [#allocation3]
    $region5: #{_lambda_.1} parent=1 // pred_fallthru
      _
    // Predicated region
    $region6: #{_lambda_.1} parent=1 // pred_check
      _
    $region7: #{_lambda_.1} parent=1 // pred_check_branch
      %24 = sbr.rel (0) target = $region9
    $region8: #{_lambda_.1} parent=1 // pred_region
      %s26 = ssub.s32 256, 256
      %27 = vsyncadd [#allocation6], %s26
      %s28 = sshll.u32 [#allocation5], 4
      %s29 = int_to_ptr.vmem [resolvable:$true] %s28
      %34 = dma.hbm_to_vmem [thread:$0]  %s1, 256, %s29, [#allocation6], 64, 64, 4
    $region9: #{_lambda_.1} parent=1 // pred_fallthru
      _
    // Predicated region
    $region10: #{_lambda_.1} parent=1 // pred_check
      _
    $region11: #{_lambda_.1} parent=1 // pred_check_branch
      %36 = sbr.rel (0) target = $region13
    $region12: #{_lambda_.1} parent=1 // pred_region
      _
    $region13: #{_lambda_.1} parent=1 // pred_fallthru
      _
    // Predicated region
    $region14: #{_lambda_.1} parent=1 // pred_check
      _
    $region15: #{_lambda_.1} parent=1 // pred_check_branch
      %38 = sbr.rel (0) target = $region17
    $region16: #{_lambda_.1} parent=1 // pred_region
      %s40 = ssub.s32 1024, 1024
      %41 = vsyncadd [#allocation6], %s40
      %s42 = sshll.u32 [#allocation7], 4
      %s43 = int_to_ptr.vmem [resolvable:$true] %s42
      %48 = dma.hbm_to_vmem [thread:$0]  %s3, 1024, %s43, [#allocation6], 64, 64, 4
    $region17: #{_lambda_.1} parent=1 // pred_fallthru
      _
    // Predicated region
    $region18: #{_lambda_.1} parent=1 // pred_check
      _
    $region19: #{_lambda_.1} parent=1 // pred_check_branch
      %50 = sbr.rel (0) target = $region21
    $region20: #{_lambda_.1} parent=1 // pred_region
      _
    $region21: #{_lambda_.1} parent=1 // pred_fallthru
      _
    // Predicated region
    $region22: #{_lambda_.1} parent=1 // pred_check
      _
    $region23: #{_lambda_.1} parent=1 // pred_check_branch
      %52 = sbr.rel (0) target = $region25
    $region24: #{_lambda_.1} parent=1 // pred_region
      %53 = dma.done [#allocation3], 128
    $region25: #{_lambda_.1} parent=1 // pred_fallthru
      _
    // Predicated region
    $region26: #{_lambda_.1} parent=1 // pred_check
      _
    $region27: #{_lambda_.1} parent=1 // pred_check_branch
      %55 = sbr.rel (0) target = $region29
    $region28: #{_lambda_.1} parent=1 // pred_region
      %56 = dma.done [#allocation6], 256
    $region29: #{_lambda_.1} parent=1 // pred_fallthru
      _
    // Predicated region
    $region30: #{_lambda_.1} parent=1 // pred_check
      _
    $region31: #{_lambda_.1} parent=1 // pred_check_branch
      %58 = sbr.rel (0) target = $region33
    $region32: #{_lambda_.1} parent=1 // pred_region
      %59 = dma.done [#allocation6], 1024
    $region33: #{_lambda_.1} parent=1 // pred_fallthru
      _
    %v61 = vld [vmem:[#allocation2] sm:$0xff]
    %v62 = vpack.c.bf16 %v61, %v61
    %v63 = vld [vmem:[#allocation5] sm:$0xf]
    %v64 = vld [vmem:[#allocation5 + $0x4] sm:$0xf]
    %v65 = vld [vmem:[#allocation5 + $0x8] sm:$0xf]
    %v66 = vld [vmem:[#allocation5 + $0xc] sm:$0xf]
    %v67 = vld [vmem:[%s2] sm:$0x1]
    %v69 = vlaneseq
    %v70 = vshrl.u32 %v69, 7
    %v71 = vsub.s32 0, %v70
    %v72 = vrot.slane %v67, %v71
    %v78 = vunpack.c.l.b16 %v63
    %v79 = vunpack.c.l.b16 %v64
    %v80 = vunpack.c.l.b16 %v65
    %v81 = vunpack.c.l.b16 %v66
    %v82 = vpack.c.b16 %v79, %v78
    %v83 = vpack.c.b16 %v81, %v80
    %vm86 = vcmask 261120
    %v88 = vsel %vm86, %v62, 0
    %90 = vmatprep.subr.bf16.mxu0 0
    %91 = vmatpush1.bf16.msra.mxu0 0
    %92 = vmatprep.subr.bf16.mxu0 0
    %93 = vmatpush1.bf16.msra.mxu0 0
    %94 = vmatprep.subr.bf16.mxu0 0
    %95 = vmatpush1.bf16.msra.mxu0 0
    %96 = vmatprep.subr.bf16.mxu0 0
    %97 = vmatpush1.bf16.msra.mxu0 0
    %98 = vmatprep.subr.bf16.mxu0 0
    %99 = vmatpush1.bf16.msra.mxu0 0
    %100 = vmatprep.subr.bf16.mxu0 0
    %101 = vmatpush1.bf16.msra.mxu0 0
    %102 = vmatprep.subr.bf16.mxu0 0
    %103 = vmatpush1.bf16.msra.mxu0 %v83
    %104 = vmatprep.subr.bf16.mxu0 0
    %105 = vmatpush1.bf16.msra.mxu0 %v82
    %106 = vmatprep.subr.bf16.mxu0 0
    %107 = vmatpush2.bf16.msra.mxu0 0
    %108 = vmatprep.subr.bf16.mxu0 0
    %109 = vmatpush2.bf16.msra.mxu0 0
    %110 = vmatprep.subr.bf16.mxu0 0
    %111 = vmatpush2.bf16.msra.mxu0 0
    %112 = vmatprep.subr.bf16.mxu0 0
    %113 = vmatpush2.bf16.msra.mxu0 0
    %114 = vmatprep.subr.bf16.mxu0 0
    %115 = vmatpush2.bf16.msra.mxu0 0
    %116 = vmatprep.subr.bf16.mxu0 0
    %117 = vmatpush2.bf16.msra.mxu0 0
    %118 = vmatprep.subr.bf16.mxu0 0
    %119 = vmatpush2.bf16.msra.mxu0 0
    %120 = vmatprep.subr.bf16.mxu0 0
    %121 = vmatpush2.bf16.msra.mxu0 0
    %122 = vmatprep.mubr.bf16.mxu0 0
    %123 = vmatmul.mubr.bf16.gmra.mxu0 %v88
    %v124 = vpop.f32.mrf.mxu0
    %v125 = vadd.f32 %v72, %v124
    %v126 = vpop.f32.mrf.mxu0
    %v127 = vpop.f32.mrf.mxu0
    %v128 = vpop.f32.mrf.mxu0
    %129 = vdwg.mxu0
    %v130 = vmax.f32 %v125, 0.0
    %v131 = vpack.c.bf16 %v130, %v130
    %v132 = vld [vmem:[#allocation7] sm:$0xf]
    %v133 = vld [vmem:[#allocation7 + $0x4] sm:$0xf]
    %v134 = vld [vmem:[#allocation7 + $0x8] sm:$0xf]
    %v135 = vld [vmem:[#allocation7 + $0xc] sm:$0xf]
    %v136 = vld [vmem:[#allocation7 + $0x10] sm:$0xf]
    %v137 = vld [vmem:[#allocation7 + $0x14] sm:$0xf]
    %v138 = vld [vmem:[#allocation7 + $0x18] sm:$0xf]
    %v139 = vld [vmem:[#allocation7 + $0x1c] sm:$0xf]
    %v140 = vld [vmem:[#allocation7 + $0x20] sm:$0xf]
    %v141 = vld [vmem:[#allocation7 + $0x24] sm:$0xf]
    %v142 = vld [vmem:[#allocation7 + $0x28] sm:$0xf]
    %v143 = vld [vmem:[#allocation7 + $0x2c] sm:$0xf]
    %v144 = vld [vmem:[#allocation7 + $0x30] sm:$0xf]
    %v145 = vld [vmem:[#allocation7 + $0x34] sm:$0xf]
    %v146 = vld [vmem:[#allocation7 + $0x38] sm:$0xf]
    %v147 = vld [vmem:[#allocation7 + $0x3c] sm:$0xf]
    %v148 = vld [vmem:[%s4] sm:$0x1]
    %v150 = vlaneseq
    %v151 = vshrl.u32 %v150, 7
    %v152 = vsub.s32 0, %v151
    %v153 = vrot.slane %v148, %v152
    %v171 = vunpack.c.l.b16 %v132
    %v172 = vunpack.c.l.b16 %v133
    %v173 = vunpack.c.l.b16 %v134
    %v174 = vunpack.c.l.b16 %v135
    %v175 = vunpack.c.l.b16 %v136
    %v176 = vunpack.c.l.b16 %v137
    %v177 = vunpack.c.l.b16 %v138
    %v178 = vunpack.c.l.b16 %v139
    %v179 = vunpack.c.l.b16 %v140
    %v180 = vunpack.c.l.b16 %v141
    %v181 = vunpack.c.l.b16 %v142
    %v182 = vunpack.c.l.b16 %v143
    %v183 = vunpack.c.l.b16 %v144
    %v184 = vunpack.c.l.b16 %v145
    %v185 = vunpack.c.l.b16 %v146
    %v186 = vunpack.c.l.b16 %v147
    %v187 = vpack.c.b16 %v172, %v171
    %v188 = vpack.c.b16 %v174, %v173
    %v189 = vpack.c.b16 %v176, %v175
    %v190 = vpack.c.b16 %v178, %v177
    %v191 = vpack.c.b16 %v180, %v179
    %v192 = vpack.c.b16 %v182, %v181
    %v193 = vpack.c.b16 %v184, %v183
    %v194 = vpack.c.b16 %v186, %v185
    %203 = vmatprep.subr.bf16.mxu0 0
    %204 = vmatpush1.bf16.msra.mxu0 %v194
    %205 = vmatprep.subr.bf16.mxu0 0
    %206 = vmatpush1.bf16.msra.mxu0 %v193
    %207 = vmatprep.subr.bf16.mxu0 0
    %208 = vmatpush1.bf16.msra.mxu0 %v192
    %209 = vmatprep.subr.bf16.mxu0 0
    %210 = vmatpush1.bf16.msra.mxu0 %v191
    %211 = vmatprep.subr.bf16.mxu0 0
    %212 = vmatpush1.bf16.msra.mxu0 %v190
    %213 = vmatprep.subr.bf16.mxu0 0
    %214 = vmatpush1.bf16.msra.mxu0 %v189
    %215 = vmatprep.subr.bf16.mxu0 0
    %216 = vmatpush1.bf16.msra.mxu0 %v188
    %217 = vmatprep.subr.bf16.mxu0 0
    %218 = vmatpush1.bf16.msra.mxu0 %v187
    %219 = vmatprep.subr.bf16.mxu0 0
    %220 = vmatpush2.bf16.msra.mxu0 0
    %221 = vmatprep.subr.bf16.mxu0 0
    %222 = vmatpush2.bf16.msra.mxu0 0
    %223 = vmatprep.subr.bf16.mxu0 0
    %224 = vmatpush2.bf16.msra.mxu0 0
    %225 = vmatprep.subr.bf16.mxu0 0
    %226 = vmatpush2.bf16.msra.mxu0 0
    %227 = vmatprep.subr.bf16.mxu0 0
    %228 = vmatpush2.bf16.msra.mxu0 0
    %229 = vmatprep.subr.bf16.mxu0 0
    %230 = vmatpush2.bf16.msra.mxu0 0
    %231 = vmatprep.subr.bf16.mxu0 0
    %232 = vmatpush2.bf16.msra.mxu0 0
    %233 = vmatprep.subr.bf16.mxu0 0
    %234 = vmatpush2.bf16.msra.mxu0 0
    %235 = vmatprep.mubr.bf16.mxu0 0
    %236 = vmatmul.mubr.bf16.gmra.mxu0 %v131
    %v237 = vpop.f32.mrf.mxu0
    %v238 = vadd.f32 %v153, %v237
    %v239 = vpop.f32.mrf.mxu0
    %v240 = vpop.f32.mrf.mxu0
    %v241 = vpop.f32.mrf.mxu0
    %242 = vdwg.mxu0
    %243 = vst [vmem:[#allocation8] sm:$0xff] %v238
    // Predicated region
    $region34: #{_lambda_.1} parent=1 // pred_check
      _
    $region35: #{_lambda_.1} parent=1 // pred_check_branch
      %245 = sbr.rel (0) target = $region37
    $region36: #{_lambda_.1} parent=1 // pred_region
      %s247 = ssub.s32 128, 128
      %248 = vsyncadd [#allocation4], %s247
      %s250 = sshll.u32 [#allocation8], 4
      %s251 = int_to_ptr.vmem [resolvable:$true] %s250
      %253 = dma.vmem_to_hbm [thread:$0]  %s251, 128, %s5, [#allocation4]
    $region37: #{_lambda_.1} parent=1 // pred_fallthru
      _
    // Predicated region
    $region38: #{_lambda_.1} parent=1 // pred_check
      _
    $region39: #{_lambda_.1} parent=1 // pred_check_branch
      %255 = sbr.rel (0) target = $region41
    $region40: #{_lambda_.1} parent=1 // pred_region
      %256 = dma.done [#allocation4], 128
    $region41: #{_lambda_.1} parent=1 // pred_fallthru
      _
    %257 = vsyncpa [#allocation3], 1
    %258 = vsyncpa [#allocation6], 1
    %259 = vsyncpa [#allocation4], 1

</llo_original>
